<compile_context>
chip_gen: v6e
topology: v6e:2x2x1
jax: 0.10.0
libtpu: 0.0.40
codegen_flags: <defaults>
</compile_context>

<pallas_src>
import functools

import jax
import jax.numpy as jnp
from jax.experimental import pallas as pl
from jax.experimental.pallas import tpu as pltpu

_NUM_BOX = 4  # cx, cy, w, h


# ----------------------------------------------------------------------------
# Fused per-layer kernel: weighted CE (labels) + masked L1/GIoU (boxes) +
# sigmoid focal (actions), with a scalar-prefetched gather of matched rows.
# ----------------------------------------------------------------------------
def _set_criterion_kernel(
    idx_ref,      # SMEM (L, Mp) int32 -- flat matched row idx per layer (pad = 0)
    logits_ref,   # (N, C1)   float    -- this layer's logits, N = Q*B rows
    cls_ref,      # (N, 1)    int32    -- target classes paired row-wise
    w_ref,        # (1, C1)   float    -- empty_weight
    ba_ref,       # (N, W)    float    -- [pred boxes(4) | action logits(A)] per query
    tgt_ref,      # (Mp, W+1) float    -- [tgt boxes(4) | tgt actions(A) | valid(1)]
    out_ref,      # (8, 128)  f32      -- row 0, lanes 0..3 = weighted losses
    g_ref,        # VMEM scratch (Mp, W) f32 -- gathered matched predictions
    *, alpha, gamma, w_cls, w_bbox, w_giou, w_action,
):
    f32 = jnp.float32
    layer = pl.program_id(0)

    # ---------------- loss_labels: weighted cross entropy -------------------
    x = logits_ref[...].astype(f32)                                   # (N, C1)
    n, c1 = x.shape
    xmax = jnp.max(x, axis=-1, keepdims=True)
    lse = xmax + jnp.log(jnp.sum(jnp.exp(x - xmax), axis=-1, keepdims=True))
    cls_ids = jax.lax.broadcasted_iota(jnp.int32, (n, c1), 1)
    onehot = (cls_ids == cls_ref[...]).astype(f32)                    # (N, C1)
    nll = lse - jnp.sum(onehot * x, axis=-1, keepdims=True)           # (N, 1)
    wv = jnp.sum(onehot * w_ref[...].astype(f32), axis=-1, keepdims=True)
    loss_ce = (jnp.sum(wv * nll, axis=(0, 1), keepdims=True)
               / jnp.sum(wv, axis=(0, 1), keepdims=True))             # (1, 1)

    # ------------- scalar-prefetched gather of matched rows -----------------
    # Mp dynamic row loads (indices from SMEM) + static stores into scratch.
    # Replaces the old O(M*N) one-hot + MXU matmuls entirely.
    mp, wp1 = tgt_ref.shape
    w_cols = wp1 - 1                                                  # = 4 + A
    for i in range(mp):                       # Mp is small & static; unrolled
        r = idx_ref[layer, i]
        g_ref[pl.ds(i, 1), :] = ba_ref[pl.ds(r, 1), :].astype(f32)
    src = g_ref[...]                                                  # (Mp, W)

    tgt = tgt_ref[...].astype(f32)                                    # (Mp, W+1)
    valid = tgt[:, w_cols:w_cols + 1]                                 # (Mp, 1)
    nvalid = jnp.sum(valid, axis=(0, 1), keepdims=True)               # (1, 1)

    # ---------------- loss_boxes: masked L1 + diag-GIoU ---------------------
    src_boxes = src[:, :_NUM_BOX]
    tgt_boxes = tgt[:, :_NUM_BOX]
    keep = ((tgt_boxes[:, 2:3] * tgt_boxes[:, 3:4]) > 0.0).astype(f32) * valid
    nkeep = jnp.sum(keep, axis=(0, 1), keepdims=True)

    # F.l1_loss(..., 'mean') over kept rows == sum / (nkeep * 4)
    l1_sum = jnp.sum(jnp.abs(src_boxes - tgt_boxes) * keep,
                     axis=(0, 1), keepdims=True)
    loss_bbox = l1_sum / jnp.maximum(nkeep * float(_NUM_BOX), 1.0)

    def to_xyxy(bx):
        cx, cy, w, h = bx[:, 0:1], bx[:, 1:2], bx[:, 2:3], bx[:, 3:4]
        return cx - 0.5 * w, cy - 0.5 * h, cx + 0.5 * w, cy + 0.5 * h

    sx1, sy1, sx2, sy2 = to_xyxy(src_boxes)
    tx1, ty1, tx2, ty2 = to_xyxy(tgt_boxes)
    area_s = (sx2 - sx1) * (sy2 - sy1)
    area_t = (tx2 - tx1) * (ty2 - ty1)
    inter = (jnp.maximum(jnp.minimum(sx2, tx2) - jnp.maximum(sx1, tx1), 0.0)
             * jnp.maximum(jnp.minimum(sy2, ty2) - jnp.maximum(sy1, ty1), 0.0))
    union = area_s + area_t - inter
    iou = inter / jnp.maximum(union, 1e-9)
    area_c = ((jnp.maximum(sx2, tx2) - jnp.minimum(sx1, tx1))
              * (jnp.maximum(sy2, ty2) - jnp.minimum(sy1, ty1)))
    giou = iou - (area_c - union) / jnp.maximum(area_c, 1e-9)         # (Mp, 1)
    giou_sum = jnp.sum((1.0 - giou) * keep, axis=(0, 1), keepdims=True)
    loss_giou = giou_sum / jnp.maximum(nkeep, 1.0)

    has_keep = (nkeep > 0.0).astype(f32)   # reference returns 0 when no kept box
    loss_bbox = loss_bbox * has_keep
    loss_giou = loss_giou * has_keep

    # ---------------- loss_actions_focal (alpha=0.25, gamma=2.0) ------------
    xa = src[:, _NUM_BOX:w_cols]                                      # (Mp, A)
    t = tgt[:, _NUM_BOX:w_cols]                                       # (Mp, A)
    e = jnp.exp(-jnp.abs(xa))                      # one exp/elem on the EUP
    inv1pe = pl.reciprocal(1.0 + e, approx=True)   # EUP approx reciprocal
    p = jnp.where(xa >= 0.0, 1.0, e) * inv1pe      # sigmoid from the shared exp
    bce = jnp.maximum(xa, 0.0) - xa * t + jnp.log1p(e)
    p_t = p * t + (1.0 - p) * (1.0 - t)
    one_m_pt = 1.0 - p_t
    if gamma == 2.0:
        mod = one_m_pt * one_m_pt                  # multiply, not pow
    else:
        mod = one_m_pt ** gamma
    alpha_t = alpha * t + (1.0 - alpha) * (1.0 - t)
    focal = alpha_t * bce * mod * valid            # pad rows masked out
    has_match = (nvalid > 0.0).astype(f32)         # trivial branch -> 0
    loss_action = (jnp.sum(focal, axis=(0, 1), keepdims=True)
                   / jnp.maximum(nvalid, 1.0)) * has_match

    # ---------------- full-tile, pre-weighted output -------------------------
    lane = jax.lax.broadcasted_iota(jnp.int32, (8, 128), 1)
    row = jax.lax.broadcasted_iota(jnp.int32, (8, 128), 0)

    def put(i, v):
        return jnp.where((row == 0) & (lane == i),
                         jnp.broadcast_to(v, (8, 128)), 0.0)

    out_ref[...] = (put(0, loss_ce * w_cls)
                    + put(1, loss_bbox * w_bbox)
                    + put(2, loss_giou * w_giou)
                    + put(3, loss_action * w_action))


def _fused_losses_call(flat_idx, logits_flat, cls_flat, empty_weight, ba_flat,
                       tgt_pad, *, n, m_pad, w, c1, num_layers,
                       alpha, gamma, weights):
    kern = functools.partial(
        _set_criterion_kernel, alpha=alpha, gamma=gamma,
        w_cls=float(weights["cls"]), w_bbox=float(weights["bbox"]),
        w_giou=float(weights["giou"]), w_action=float(weights["action"]))

    grid_spec = pltpu.PrefetchScalarGridSpec(
        num_scalar_prefetch=1,                 # flat_idx -> SMEM
        grid=(num_layers,),                    # one decoder layer per grid step
        in_specs=[
            pl.BlockSpec((n, c1), lambda l, idx: (l, 0)),        # logits
            pl.BlockSpec((n, 1), lambda l, idx: (l, 0)),         # target classes
            pl.BlockSpec((1, c1), lambda l, idx: (0, 0)),        # empty_weight
            pl.BlockSpec((n, w), lambda l, idx: (l, 0)),         # packed boxes|actions
            pl.BlockSpec((m_pad, w + 1), lambda l, idx: (l, 0)), # matched targets
        ],
        out_specs=pl.BlockSpec((8, 128), lambda l, idx: (l, 0)),
        scratch_shapes=[pltpu.VMEM((m_pad, w), jnp.float32)],
    )

    in_bytes = sum(int(a.size) * a.dtype.itemsize for a in
                   (flat_idx, logits_flat, cls_flat, empty_weight, ba_flat, tgt_pad))
    cost = pl.CostEstimate(
        flops=int(num_layers * (8 * n * c1 + 40 * m_pad * w)),
        transcendentals=int(num_layers * (n * c1 + 3 * m_pad * w)),
        bytes_accessed=int(in_bytes + num_layers * 8 * 128 * 4),
    )

    out = pl.pallas_call(
        kern,
        out_shape=jax.ShapeDtypeStruct((num_layers * 8, 128), jnp.float32),
        grid_spec=grid_spec,
        compiler_params=pltpu.CompilerParams(
            dimension_semantics=("parallel",)),   # layers split across TCs on v7x
        cost_estimate=cost,
    )(flat_idx, logits_flat, cls_flat, empty_weight, ba_flat, tgt_pad)
    return out.reshape(num_layers, 8, 128)


# ----------------------------------------------------------------------------
# SetCriterion forward (losses = ['labels', 'boxes', 'actions_focal'])
# Inputs are stacked over decoder layers: layer 0 = final output, layers 1..
# are aux_outputs (the reference's aux_loss loop), all in one fused launch.
# ----------------------------------------------------------------------------
class SetCriterionPallas:
    def __init__(self, num_classes, num_actions, loss_weights, eos_coefficient=0.1,
                 focal_alpha=0.25, focal_gamma=2.0):
        self.num_classes = num_classes
        self.num_actions = num_actions
        self.loss_weights = loss_weights
        self.focal_alpha = focal_alpha
        self.focal_gamma = focal_gamma
        # register_loss_weights: empty_weight buffer (deterministic init)
        ew = jnp.ones((num_classes + 1,), jnp.float32)
        self.empty_weight = ew.at[-1].set(eos_coefficient)

    def __call__(self, pred_logits, pred_boxes, pred_actions,
                 target_classes, target_boxes_matched, target_actions_matched,
                 src_idx, batch_idx):
        L, Q, B, C1 = pred_logits.shape
        A = pred_actions.shape[-1]
        M = src_idx.shape[-1]
        N = Q * B
        W = _NUM_BOX + A
        Mp = max(8, ((M + 7) // 8) * 8)          # sublane-aligned matched rows

        # Contiguous reshapes only.  The reference's per-batch cat is a (1,0,2)
        # transpose, but weighted CE with mean reduction is permutation
        # invariant over (logit-row, target) pairs, so a free reshape of BOTH
        # tensors (keeping the pairing) is equivalent.
        logits_flat = pred_logits.reshape(L * N, C1)
        cls_flat = target_classes.reshape(L * N, 1).astype(jnp.int32)
        # Pack boxes + action logits into one operand (one lane-padded VMEM
        # slab / DMA per layer instead of two).
        ba_flat = jnp.concatenate(
            [pred_boxes.reshape(L, N, _NUM_BOX),
             pred_actions.reshape(L, N, A)], axis=-1).reshape(L * N, W)
        # Matched targets + validity column, zero-padded to Mp rows (pad rows
        # are masked inside the kernel, including in the normalizers).
        tgt = jnp.concatenate(
            [target_boxes_matched.astype(jnp.float32),
             target_actions_matched.astype(jnp.float32),
             jnp.ones((L, M, 1), jnp.float32)], axis=-1)         # (L, M, W+1)
        tgt_pad = jnp.pad(tgt, ((0, 0), (0, Mp - M), (0, 0))).reshape(L * Mp, W + 1)
        # pred[src_idx, batch_idx] on a (Q, B, ...) tensor == row (src*B + b)
        # of the row-major reshape; pad indices with 0 (masked via validity).
        flat_idx = (src_idx.astype(jnp.int32) * B + batch_idx.astype(jnp.int32))
        flat_idx = jnp.pad(flat_idx, ((0, 0), (0, Mp - M)))       # (L, Mp)

        out = _fused_losses_call(
            flat_idx, logits_flat, cls_flat, self.empty_weight.reshape(1, C1),
            ba_flat, tgt_pad,
            n=N, m_pad=Mp, w=W, c1=C1, num_layers=L,
            alpha=self.focal_alpha, gamma=self.focal_gamma,
            weights=self.loss_weights)

        names = ("loss_tx_cls", "loss_tx_bbox", "loss_tx_giou", "loss_tx_action")
        losses = {}
        for l in range(L):
            suffix = "" if l == 0 else f"_aux{l - 1}"
            for j, nm in enumerate(names):
                losses[nm + suffix] = out[l, 0, j]
        return losses


if __name__ == "__main__":
    key = jax.random.PRNGKey(0)
    L = 3                # final output + 2 aux decoder layers (one fused launch)
    Q, B = 8, 2          # queries, batch
    NUM_CLASSES = 8      # + 1 no-object class
    NUM_ACTIONS = 16
    M = 6                # matched (query, gt) pairs per layer

    ks = jax.random.split(key, 8)
    pred_logits = jax.random.normal(ks[0], (L, Q, B, NUM_CLASSES + 1), jnp.float32)
    pred_boxes = jax.nn.sigmoid(jax.random.normal(ks[1], (L, Q, B, 4), jnp.float32))
    pred_actions = jax.random.normal(ks[2], (L, Q, B, NUM_ACTIONS), jnp.float32)

    # targets as the matcher would produce them (per layer)
    target_classes = jax.random.randint(ks[3], (L, Q, B), 0, NUM_CLASSES + 1, jnp.int32)
    tb = jax.nn.sigmoid(jax.random.normal(ks[4], (L, M, 4), jnp.float32)) * 0.5 + 0.1
    # make one degenerate target box per layer to exercise the keep mask
    target_boxes_matched = tb.at[:, -1, 2].set(0.0)
    target_actions_matched = (
        jax.random.uniform(ks[5], (L, M, NUM_ACTIONS)) > 0.7
    ).astype(jnp.float32)
    src_idx = jax.random.randint(ks[6], (L, M), 0, Q, jnp.int32)
    batch_idx = jnp.tile(jnp.array([0, 0, 0, 1, 1, 1], jnp.int32), (L, 1))

    criterion = SetCriterionPallas(
        num_classes=NUM_CLASSES,
        num_actions=NUM_ACTIONS,
        loss_weights={"cls": 1.0, "bbox": 5.0, "giou": 2.0, "action": 1.0},
        eos_coefficient=0.1,
    )

    losses = criterion(
        pred_logits, pred_boxes, pred_actions,
        target_classes, target_boxes_matched, target_actions_matched,
        src_idx, batch_idx,
    )
    losses = jax.block_until_ready(losses)
    assert len(losses) == 4 * L
    assert all(bool(jnp.isfinite(v)) for v in losses.values())
    print("KERNEL_OK")
</pallas_src>

<mosaic_0001>
module attributes {stable_mosaic.version = 11 : i64} {
  func.func @_set_criterion_kernel(%arg0: i32, %arg1: memref<3x8xi32, #tpu.memory_space<smem>>, %arg2: memref<16x9xf32, #tpu.memory_space<vmem>>, %arg3: memref<16x1xi32, #tpu.memory_space<vmem>>, %arg4: memref<1x9xf32, #tpu.memory_space<vmem>>, %arg5: memref<16x20xf32, #tpu.memory_space<vmem>>, %arg6: memref<8x21xf32, #tpu.memory_space<vmem>>, %arg7: memref<8x128xf32, #tpu.memory_space<vmem>>, %arg8: memref<8x20xf32, #tpu.memory_space<vmem>>) attributes {dimension_semantics = [#tpu.dimension_semantics<parallel>], iteration_bounds = array<i64: 3>, scalar_prefetch = 1 : i64, scratch_operands = 1 : i64, tpu.core_type = #tpu.core_type<tc>, window_params = [{transform_indices = @transform_0, window_bounds = array<i64: 16, 9>}, {transform_indices = @transform_1, window_bounds = array<i64: 16, 1>}, {pipeline_mode = #tpu.pipeline_mode<synchronous>, transform_indices = @transform_2, window_bounds = array<i64: 1, 9>}, {transform_indices = @transform_3, window_bounds = array<i64: 16, 20>}, {transform_indices = @transform_4, window_bounds = array<i64: 8, 21>}, {transform_indices = @transform_5, window_bounds = array<i64: 8, 128>}]} {
    %c0 = arith.constant 0 : index
    %c0_0 = arith.constant 0 : index
    %0 = vector.load %arg2[%c0, %c0_0] : memref<16x9xf32, #tpu.memory_space<vmem>>, vector<16x9xf32>
    %cst = arith.constant dense<0xFF800000> : vector<16xf32>
    %1 = vector.multi_reduction <maximumf>, %0, %cst [1] : vector<16x9xf32> to vector<16xf32>
    %2 = vector.shape_cast %1 : vector<16xf32> to vector<16x1xf32>
    %3 = vector.broadcast %2 : vector<16x1xf32> to vector<16x9xf32>
    %4 = arith.subf %0, %3 : vector<16x9xf32>
    %5 = math.exp %4 : vector<16x9xf32>
    %cst_1 = arith.constant dense<0.000000e+00> : vector<16xf32>
    %6 = vector.multi_reduction <add>, %5, %cst_1 [1] : vector<16x9xf32> to vector<16xf32>
    %7 = vector.shape_cast %6 : vector<16xf32> to vector<16x1xf32>
    %8 = math.log %7 : vector<16x1xf32>
    %9 = arith.addf %2, %8 : vector<16x1xf32>
    %10 = tpu.iota {dimensions = array<i32: 1>} : vector<16x9xi32>
    %c0_2 = arith.constant 0 : index
    %c0_3 = arith.constant 0 : index
    %11 = vector.load %arg3[%c0_2, %c0_3] : memref<16x1xi32, #tpu.memory_space<vmem>>, vector<16x1xi32>
    %12 = vector.broadcast %11 : vector<16x1xi32> to vector<16x9xi32>
    %13 = arith.cmpi eq, %10, %12 : vector<16x9xi32>
    %14 = arith.extui %13 : vector<16x9xi1> to vector<16x9xi32>
    %15 = arith.sitofp %14 : vector<16x9xi32> to vector<16x9xf32>
    %16 = arith.mulf %15, %0 : vector<16x9xf32>
    %cst_4 = arith.constant dense<0.000000e+00> : vector<16xf32>
    %17 = vector.multi_reduction <add>, %16, %cst_4 [1] : vector<16x9xf32> to vector<16xf32>
    %18 = vector.shape_cast %17 : vector<16xf32> to vector<16x1xf32>
    %19 = arith.subf %9, %18 : vector<16x1xf32>
    %c0_5 = arith.constant 0 : index
    %c0_6 = arith.constant 0 : index
    %20 = vector.load %arg4[%c0_5, %c0_6] : memref<1x9xf32, #tpu.memory_space<vmem>>, vector<1x9xf32>
    %21 = vector.broadcast %20 : vector<1x9xf32> to vector<16x9xf32>
    %22 = arith.mulf %15, %21 : vector<16x9xf32>
    %cst_7 = arith.constant dense<0.000000e+00> : vector<16xf32>
    %23 = vector.multi_reduction <add>, %22, %cst_7 [1] : vector<16x9xf32> to vector<16xf32>
    %24 = vector.shape_cast %23 : vector<16xf32> to vector<16x1xf32>
    %25 = arith.mulf %24, %19 : vector<16x1xf32>
    %26 = vector.shape_cast %25 : vector<16x1xf32> to vector<1x16x1xf32>
    %cst_8 = arith.constant dense<0.000000e+00> : vector<1xf32>
    %27 = vector.multi_reduction <add>, %26, %cst_8 [1, 2] : vector<1x16x1xf32> to vector<1xf32>
    %28 = vector.shape_cast %27 : vector<1xf32> to vector<1x1x1xf32>
    %29 = vector.extract %28[0, 0, 0] : f32 from vector<1x1x1xf32>
    %30 = vector.broadcast %29 : f32 to vector<1x1xf32>
    %31 = vector.shape_cast %24 : vector<16x1xf32> to vector<1x16x1xf32>
    %cst_9 = arith.constant dense<0.000000e+00> : vector<1xf32>
    %32 = vector.multi_reduction <add>, %31, %cst_9 [1, 2] : vector<1x16x1xf32> to vector<1xf32>
    %33 = vector.shape_cast %32 : vector<1xf32> to vector<1x1x1xf32>
    %34 = vector.extract %33[0, 0, 0] : f32 from vector<1x1x1xf32>
    %35 = vector.broadcast %34 : f32 to vector<1x1xf32>
    %36 = arith.divf %30, %35 : vector<1x1xf32>
    %37 = arith.index_cast %arg0 : i32 to index
    %c0_10 = arith.constant 0 : index
    %38 = memref.load %arg1[%37, %c0_10] : memref<3x8xi32, #tpu.memory_space<smem>>
    %39 = arith.index_cast %38 : i32 to index
    %c0_11 = arith.constant 0 : index
    %40 = vector.load %arg5[%39, %c0_11] : memref<16x20xf32, #tpu.memory_space<vmem>>, vector<1x20xf32>
    %c0_12 = arith.constant 0 : index
    %c0_13 = arith.constant 0 : index
    %41 = vector.load %arg8[%c0_12, %c0_13] : memref<8x20xf32, #tpu.memory_space<vmem>>, vector<1x20xf32>
    tpu.vector_store %arg8[%c0_12, %c0_13], %40 {strides = array<i32>} : memref<8x20xf32, #tpu.memory_space<vmem>>, vector<1x20xf32>,
    %42 = arith.index_cast %arg0 : i32 to index
    %c1 = arith.constant 1 : index
    %43 = memref.load %arg1[%42, %c1] : memref<3x8xi32, #tpu.memory_space<smem>>
    %44 = arith.index_cast %43 : i32 to index
    %c0_14 = arith.constant 0 : index
    %45 = vector.load %arg5[%44, %c0_14] : memref<16x20xf32, #tpu.memory_space<vmem>>, vector<1x20xf32>
    %c1_15 = arith.constant 1 : index
    %c0_16 = arith.constant 0 : index
    %46 = vector.load %arg8[%c1_15, %c0_16] : memref<8x20xf32, #tpu.memory_space<vmem>>, vector<1x20xf32>
    tpu.vector_store %arg8[%c1_15, %c0_16], %45 {strides = array<i32>} : memref<8x20xf32, #tpu.memory_space<vmem>>, vector<1x20xf32>,
    %47 = arith.index_cast %arg0 : i32 to index
    %c2 = arith.constant 2 : index
    %48 = memref.load %arg1[%47, %c2] : memref<3x8xi32, #tpu.memory_space<smem>>
    %49 = arith.index_cast %48 : i32 to index
    %c0_17 = arith.constant 0 : index
    %50 = vector.load %arg5[%49, %c0_17] : memref<16x20xf32, #tpu.memory_space<vmem>>, vector<1x20xf32>
    %c2_18 = arith.constant 2 : index
    %c0_19 = arith.constant 0 : index
    %51 = vector.load %arg8[%c2_18, %c0_19] : memref<8x20xf32, #tpu.memory_space<vmem>>, vector<1x20xf32>
    tpu.vector_store %arg8[%c2_18, %c0_19], %50 {strides = array<i32>} : memref<8x20xf32, #tpu.memory_space<vmem>>, vector<1x20xf32>,
    %52 = arith.index_cast %arg0 : i32 to index
    %c3 = arith.constant 3 : index
    %53 = memref.load %arg1[%52, %c3] : memref<3x8xi32, #tpu.memory_space<smem>>
    %54 = arith.index_cast %53 : i32 to index
    %c0_20 = arith.constant 0 : index
    %55 = vector.load %arg5[%54, %c0_20] : memref<16x20xf32, #tpu.memory_space<vmem>>, vector<1x20xf32>
    %c3_21 = arith.constant 3 : index
    %c0_22 = arith.constant 0 : index
    %56 = vector.load %arg8[%c3_21, %c0_22] : memref<8x20xf32, #tpu.memory_space<vmem>>, vector<1x20xf32>
    tpu.vector_store %arg8[%c3_21, %c0_22], %55 {strides = array<i32>} : memref<8x20xf32, #tpu.memory_space<vmem>>, vector<1x20xf32>,
    %57 = arith.index_cast %arg0 : i32 to index
    %c4 = arith.constant 4 : index
    %58 = memref.load %arg1[%57, %c4] : memref<3x8xi32, #tpu.memory_space<smem>>
    %59 = arith.index_cast %58 : i32 to index
    %c0_23 = arith.constant 0 : index
    %60 = vector.load %arg5[%59, %c0_23] : memref<16x20xf32, #tpu.memory_space<vmem>>, vector<1x20xf32>
    %c4_24 = arith.constant 4 : index
    %c0_25 = arith.constant 0 : index
    %61 = vector.load %arg8[%c4_24, %c0_25] : memref<8x20xf32, #tpu.memory_space<vmem>>, vector<1x20xf32>
    tpu.vector_store %arg8[%c4_24, %c0_25], %60 {strides = array<i32>} : memref<8x20xf32, #tpu.memory_space<vmem>>, vector<1x20xf32>,
    %62 = arith.index_cast %arg0 : i32 to index
    %c5 = arith.constant 5 : index
    %63 = memref.load %arg1[%62, %c5] : memref<3x8xi32, #tpu.memory_space<smem>>
    %64 = arith.index_cast %63 : i32 to index
    %c0_26 = arith.constant 0 : index
    %65 = vector.load %arg5[%64, %c0_26] : memref<16x20xf32, #tpu.memory_space<vmem>>, vector<1x20xf32>
    %c5_27 = arith.constant 5 : index
    %c0_28 = arith.constant 0 : index
    %66 = vector.load %arg8[%c5_27, %c0_28] : memref<8x20xf32, #tpu.memory_space<vmem>>, vector<1x20xf32>
    tpu.vector_store %arg8[%c5_27, %c0_28], %65 {strides = array<i32>} : memref<8x20xf32, #tpu.memory_space<vmem>>, vector<1x20xf32>,
    %67 = arith.index_cast %arg0 : i32 to index
    %c6 = arith.constant 6 : index
    %68 = memref.load %arg1[%67, %c6] : memref<3x8xi32, #tpu.memory_space<smem>>
    %69 = arith.index_cast %68 : i32 to index
    %c0_29 = arith.constant 0 : index
    %70 = vector.load %arg5[%69, %c0_29] : memref<16x20xf32, #tpu.memory_space<vmem>>, vector<1x20xf32>
    %c6_30 = arith.constant 6 : index
    %c0_31 = arith.constant 0 : index
    %71 = vector.load %arg8[%c6_30, %c0_31] : memref<8x20xf32, #tpu.memory_space<vmem>>, vector<1x20xf32>
    tpu.vector_store %arg8[%c6_30, %c0_31], %70 {strides = array<i32>} : memref<8x20xf32, #tpu.memory_space<vmem>>, vector<1x20xf32>,
    %72 = arith.index_cast %arg0 : i32 to index
    %c7 = arith.constant 7 : index
    %73 = memref.load %arg1[%72, %c7] : memref<3x8xi32, #tpu.memory_space<smem>>
    %74 = arith.index_cast %73 : i32 to index
    %c0_32 = arith.constant 0 : index
    %75 = vector.load %arg5[%74, %c0_32] : memref<16x20xf32, #tpu.memory_space<vmem>>, vector<1x20xf32>
    %c7_33 = arith.constant 7 : index
    %c0_34 = arith.constant 0 : index
    %76 = vector.load %arg8[%c7_33, %c0_34] : memref<8x20xf32, #tpu.memory_space<vmem>>, vector<1x20xf32>
    tpu.vector_store %arg8[%c7_33, %c0_34], %75 {strides = array<i32>} : memref<8x20xf32, #tpu.memory_space<vmem>>, vector<1x20xf32>,
    %c0_35 = arith.constant 0 : index
    %c0_36 = arith.constant 0 : index
    %77 = vector.load %arg8[%c0_35, %c0_36] : memref<8x20xf32, #tpu.memory_space<vmem>>, vector<8x20xf32>
    %c0_37 = arith.constant 0 : index
    %c0_38 = arith.constant 0 : index
    %78 = vector.load %arg6[%c0_37, %c0_38] : memref<8x21xf32, #tpu.memory_space<vmem>>, vector<8x21xf32>
    %79 = vector.extract_strided_slice %78 {offsets = [0, 20], sizes = [8, 1], strides = [1, 1]} : vector<8x21xf32> to vector<8x1xf32>
    %80 = vector.shape_cast %79 : vector<8x1xf32> to vector<1x8x1xf32>
    %cst_39 = arith.constant dense<0.000000e+00> : vector<1xf32>
    %81 = vector.multi_reduction <add>, %80, %cst_39 [1, 2] : vector<1x8x1xf32> to vector<1xf32>
    %82 = vector.shape_cast %81 : vector<1xf32> to vector<1x1x1xf32>
    %83 = vector.extract %82[0, 0, 0] : f32 from vector<1x1x1xf32>
    %84 = vector.broadcast %83 : f32 to vector<1x1xf32>
    %85 = vector.extract_strided_slice %77 {offsets = [0, 0], sizes = [8, 4], strides = [1, 1]} : vector<8x20xf32> to vector<8x4xf32>
    %86 = vector.extract_strided_slice %78 {offsets = [0, 0], sizes = [8, 4], strides = [1, 1]} : vector<8x21xf32> to vector<8x4xf32>
    %87 = vector.extract_strided_slice %86 {offsets = [0, 2], sizes = [8, 1], strides = [1, 1]} : vector<8x4xf32> to vector<8x1xf32>
    %88 = vector.extract_strided_slice %86 {offsets = [0, 3], sizes = [8, 1], strides = [1, 1]} : vector<8x4xf32> to vector<8x1xf32>
    %89 = arith.mulf %87, %88 : vector<8x1xf32>
    %cst_40 = arith.constant 0.000000e+00 : f32
    %90 = vector.broadcast %cst_40 : f32 to vector<8x1xf32>
    %91 = arith.cmpf ogt, %89, %90 : vector<8x1xf32>
    %92 = arith.extui %91 : vector<8x1xi1> to vector<8x1xi32>
    %93 = arith.sitofp %92 : vector<8x1xi32> to vector<8x1xf32>
    %94 = arith.mulf %93, %79 : vector<8x1xf32>
    %95 = vector.shape_cast %94 : vector<8x1xf32> to vector<1x8x1xf32>
    %cst_41 = arith.constant dense<0.000000e+00> : vector<1xf32>
    %96 = vector.multi_reduction <add>, %95, %cst_41 [1, 2] : vector<1x8x1xf32> to vector<1xf32>
    %97 = vector.shape_cast %96 : vector<1xf32> to vector<1x1x1xf32>
    %98 = vector.extract %97[0, 0, 0] : f32 from vector<1x1x1xf32>
    %99 = vector.broadcast %98 : f32 to vector<1x1xf32>
    %100 = arith.subf %85, %86 : vector<8x4xf32>
    %101 = math.absf %100 : vector<8x4xf32>
    %102 = vector.broadcast %94 : vector<8x1xf32> to vector<8x4xf32>
    %103 = arith.mulf %101, %102 : vector<8x4xf32>
    %104 = vector.shape_cast %103 : vector<8x4xf32> to vector<1x8x4xf32>
    %cst_42 = arith.constant dense<0.000000e+00> : vector<1xf32>
    %105 = vector.multi_reduction <add>, %104, %cst_42 [1, 2] : vector<1x8x4xf32> to vector<1xf32>
    %106 = vector.shape_cast %105 : vector<1xf32> to vector<1x1x1xf32>
    %107 = vector.extract %106[0, 0, 0] : f32 from vector<1x1x1xf32>
    %108 = vector.broadcast %107 : f32 to vector<1x1xf32>
    %cst_43 = arith.constant 4.000000e+00 : f32
    %109 = vector.broadcast %cst_43 : f32 to vector<1x1xf32>
    %110 = arith.mulf %99, %109 : vector<1x1xf32>
    %cst_44 = arith.constant 1.000000e+00 : f32
    %111 = vector.broadcast %cst_44 : f32 to vector<1x1xf32>
    %112 = arith.maximumf %110, %111 : vector<1x1xf32>
    %113 = arith.divf %108, %112 : vector<1x1xf32>
    %114 = vector.extract_strided_slice %85 {offsets = [0, 0], sizes = [8, 1], strides = [1, 1]} : vector<8x4xf32> to vector<8x1xf32>
    %115 = vector.extract_strided_slice %85 {offsets = [0, 1], sizes = [8, 1], strides = [1, 1]} : vector<8x4xf32> to vector<8x1xf32>
    %116 = vector.extract_strided_slice %85 {offsets = [0, 2], sizes = [8, 1], strides = [1, 1]} : vector<8x4xf32> to vector<8x1xf32>
    %117 = vector.extract_strided_slice %85 {offsets = [0, 3], sizes = [8, 1], strides = [1, 1]} : vector<8x4xf32> to vector<8x1xf32>
    %cst_45 = arith.constant 5.000000e-01 : f32
    %118 = vector.broadcast %cst_45 : f32 to vector<8x1xf32>
    %119 = arith.mulf %118, %116 : vector<8x1xf32>
    %120 = arith.subf %114, %119 : vector<8x1xf32>
    %cst_46 = arith.constant 5.000000e-01 : f32
    %121 = vector.broadcast %cst_46 : f32 to vector<8x1xf32>
    %122 = arith.mulf %121, %117 : vector<8x1xf32>
    %123 = arith.subf %115, %122 : vector<8x1xf32>
    %cst_47 = arith.constant 5.000000e-01 : f32
    %124 = vector.broadcast %cst_47 : f32 to vector<8x1xf32>
    %125 = arith.mulf %124, %116 : vector<8x1xf32>
    %126 = arith.addf %114, %125 : vector<8x1xf32>
    %cst_48 = arith.constant 5.000000e-01 : f32
    %127 = vector.broadcast %cst_48 : f32 to vector<8x1xf32>
    %128 = arith.mulf %127, %117 : vector<8x1xf32>
    %129 = arith.addf %115, %128 : vector<8x1xf32>
    %130 = vector.extract_strided_slice %86 {offsets = [0, 0], sizes = [8, 1], strides = [1, 1]} : vector<8x4xf32> to vector<8x1xf32>
    %131 = vector.extract_strided_slice %86 {offsets = [0, 1], sizes = [8, 1], strides = [1, 1]} : vector<8x4xf32> to vector<8x1xf32>
    %132 = vector.extract_strided_slice %86 {offsets = [0, 2], sizes = [8, 1], strides = [1, 1]} : vector<8x4xf32> to vector<8x1xf32>
    %133 = vector.extract_strided_slice %86 {offsets = [0, 3], sizes = [8, 1], strides = [1, 1]} : vector<8x4xf32> to vector<8x1xf32>
    %cst_49 = arith.constant 5.000000e-01 : f32
    %134 = vector.broadcast %cst_49 : f32 to vector<8x1xf32>
    %135 = arith.mulf %134, %132 : vector<8x1xf32>
    %136 = arith.subf %130, %135 : vector<8x1xf32>
    %cst_50 = arith.constant 5.000000e-01 : f32
    %137 = vector.broadcast %cst_50 : f32 to vector<8x1xf32>
    %138 = arith.mulf %137, %133 : vector<8x1xf32>
    %139 = arith.subf %131, %138 : vector<8x1xf32>
    %cst_51 = arith.constant 5.000000e-01 : f32
    %140 = vector.broadcast %cst_51 : f32 to vector<8x1xf32>
    %141 = arith.mulf %140, %132 : vector<8x1xf32>
    %142 = arith.addf %130, %141 : vector<8x1xf32>
    %cst_52 = arith.constant 5.000000e-01 : f32
    %143 = vector.broadcast %cst_52 : f32 to vector<8x1xf32>
    %144 = arith.mulf %143, %133 : vector<8x1xf32>
    %145 = arith.addf %131, %144 : vector<8x1xf32>
    %146 = arith.subf %126, %120 : vector<8x1xf32>
    %147 = arith.subf %129, %123 : vector<8x1xf32>
    %148 = arith.mulf %146, %147 : vector<8x1xf32>
    %149 = arith.subf %142, %136 : vector<8x1xf32>
    %150 = arith.subf %145, %139 : vector<8x1xf32>
    %151 = arith.mulf %149, %150 : vector<8x1xf32>
    %152 = arith.minimumf %126, %142 : vector<8x1xf32>
    %153 = arith.maximumf %120, %136 : vector<8x1xf32>
    %154 = arith.subf %152, %153 : vector<8x1xf32>
    %cst_53 = arith.constant 0.000000e+00 : f32
    %155 = vector.broadcast %cst_53 : f32 to vector<8x1xf32>
    %156 = arith.maximumf %154, %155 : vector<8x1xf32>
    %157 = arith.minimumf %129, %145 : vector<8x1xf32>
    %158 = arith.maximumf %123, %139 : vector<8x1xf32>
    %159 = arith.subf %157, %158 : vector<8x1xf32>
    %cst_54 = arith.constant 0.000000e+00 : f32
    %160 = vector.broadcast %cst_54 : f32 to vector<8x1xf32>
    %161 = arith.maximumf %159, %160 : vector<8x1xf32>
    %162 = arith.mulf %156, %161 : vector<8x1xf32>
    %163 = arith.addf %148, %151 : vector<8x1xf32>
    %164 = arith.subf %163, %162 : vector<8x1xf32>
    %cst_55 = arith.constant 9.99999971E-10 : f32
    %165 = vector.broadcast %cst_55 : f32 to vector<8x1xf32>
    %166 = arith.maximumf %164, %165 : vector<8x1xf32>
    %167 = arith.divf %162, %166 : vector<8x1xf32>
    %168 = arith.maximumf %126, %142 : vector<8x1xf32>
    %169 = arith.minimumf %120, %136 : vector<8x1xf32>
    %170 = arith.subf %168, %169 : vector<8x1xf32>
    %171 = arith.maximumf %129, %145 : vector<8x1xf32>
    %172 = arith.minimumf %123, %139 : vector<8x1xf32>
    %173 = arith.subf %171, %172 : vector<8x1xf32>
    %174 = arith.mulf %170, %173 : vector<8x1xf32>
    %175 = arith.subf %174, %164 : vector<8x1xf32>
    %cst_56 = arith.constant 9.99999971E-10 : f32
    %176 = vector.broadcast %cst_56 : f32 to vector<8x1xf32>
    %177 = arith.maximumf %174, %176 : vector<8x1xf32>
    %178 = arith.divf %175, %177 : vector<8x1xf32>
    %179 = arith.subf %167, %178 : vector<8x1xf32>
    %cst_57 = arith.constant 1.000000e+00 : f32
    %180 = vector.broadcast %cst_57 : f32 to vector<8x1xf32>
    %181 = arith.subf %180, %179 : vector<8x1xf32>
    %182 = arith.mulf %181, %94 : vector<8x1xf32>
    %183 = vector.shape_cast %182 : vector<8x1xf32> to vector<1x8x1xf32>
    %cst_58 = arith.constant dense<0.000000e+00> : vector<1xf32>
    %184 = vector.multi_reduction <add>, %183, %cst_58 [1, 2] : vector<1x8x1xf32> to vector<1xf32>
    %185 = vector.shape_cast %184 : vector<1xf32> to vector<1x1x1xf32>
    %186 = vector.extract %185[0, 0, 0] : f32 from vector<1x1x1xf32>
    %187 = vector.broadcast %186 : f32 to vector<1x1xf32>
    %cst_59 = arith.constant 1.000000e+00 : f32
    %188 = vector.broadcast %cst_59 : f32 to vector<1x1xf32>
    %189 = arith.maximumf %99, %188 : vector<1x1xf32>
    %190 = arith.divf %187, %189 : vector<1x1xf32>
    %cst_60 = arith.constant 0.000000e+00 : f32
    %191 = vector.broadcast %cst_60 : f32 to vector<1x1xf32>
    %192 = arith.cmpf ogt, %99, %191 : vector<1x1xf32>
    %193 = arith.extui %192 : vector<1x1xi1> to vector<1x1xi32>
    %194 = arith.sitofp %193 : vector<1x1xi32> to vector<1x1xf32>
    %195 = arith.mulf %113, %194 : vector<1x1xf32>
    %196 = arith.mulf %190, %194 : vector<1x1xf32>
    %197 = vector.extract_strided_slice %77 {offsets = [0, 4], sizes = [8, 16], strides = [1, 1]} : vector<8x20xf32> to vector<8x16xf32>
    %198 = vector.extract_strided_slice %78 {offsets = [0, 4], sizes = [8, 16], strides = [1, 1]} : vector<8x21xf32> to vector<8x16xf32>
    %199 = math.absf %197 : vector<8x16xf32>
    %cst_61 = arith.constant 0.000000e+00 : f32
    %200 = vector.broadcast %cst_61 : f32 to vector<8x16xf32>
    %201 = arith.subf %200, %199 : vector<8x16xf32>
    %202 = math.exp %201 : vector<8x16xf32>
    %cst_62 = arith.constant 1.000000e+00 : f32
    %203 = vector.broadcast %cst_62 : f32 to vector<8x16xf32>
    %204 = arith.addf %203, %202 : vector<8x16xf32>
    %205 = tpu.reciprocal %204 {approx = true} : vector<8x16xf32> -> vector<8x16xf32>
    %cst_63 = arith.constant 0.000000e+00 : f32
    %206 = vector.broadcast %cst_63 : f32 to vector<8x16xf32>
    %207 = arith.cmpf oge, %197, %206 : vector<8x16xf32>
    %cst_64 = arith.constant 1.000000e+00 : f32
    %208 = vector.broadcast %cst_64 : f32 to vector<8x16xf32>
    %209 = arith.select %207, %208, %202 : vector<8x16xi1>, vector<8x16xf32>
    %210 = arith.mulf %209, %205 : vector<8x16xf32>
    %cst_65 = arith.constant 0.000000e+00 : f32
    %211 = vector.broadcast %cst_65 : f32 to vector<8x16xf32>
    %212 = arith.maximumf %197, %211 : vector<8x16xf32>
    %213 = arith.mulf %197, %198 : vector<8x16xf32>
    %214 = arith.subf %212, %213 : vector<8x16xf32>
    %215 = math.log1p %202 : vector<8x16xf32>
    %216 = arith.addf %214, %215 : vector<8x16xf32>
    %217 = arith.mulf %210, %198 : vector<8x16xf32>
    %cst_66 = arith.constant 1.000000e+00 : f32
    %218 = vector.broadcast %cst_66 : f32 to vector<8x16xf32>
    %219 = arith.subf %218, %210 : vector<8x16xf32>
    %cst_67 = arith.constant 1.000000e+00 : f32
    %220 = vector.broadcast %cst_67 : f32 to vector<8x16xf32>
    %221 = arith.subf %220, %198 : vector<8x16xf32>
    %222 = arith.mulf %219, %221 : vector<8x16xf32>
    %223 = arith.addf %217, %222 : vector<8x16xf32>
    %cst_68 = arith.constant 1.000000e+00 : f32
    %224 = vector.broadcast %cst_68 : f32 to vector<8x16xf32>
    %225 = arith.subf %224, %223 : vector<8x16xf32>
    %226 = arith.mulf %225, %225 : vector<8x16xf32>
    %cst_69 = arith.constant 2.500000e-01 : f32
    %227 = vector.broadcast %cst_69 : f32 to vector<8x16xf32>
    %228 = arith.mulf %227, %198 : vector<8x16xf32>
    %cst_70 = arith.constant 1.000000e+00 : f32
    %229 = vector.broadcast %cst_70 : f32 to vector<8x16xf32>
    %230 = arith.subf %229, %198 : vector<8x16xf32>
    %cst_71 = arith.constant 7.500000e-01 : f32
    %231 = vector.broadcast %cst_71 : f32 to vector<8x16xf32>
    %232 = arith.mulf %231, %230 : vector<8x16xf32>
    %233 = arith.addf %228, %232 : vector<8x16xf32>
    %234 = arith.mulf %233, %216 : vector<8x16xf32>
    %235 = arith.mulf %234, %226 : vector<8x16xf32>
    %236 = vector.broadcast %79 : vector<8x1xf32> to vector<8x16xf32>
    %237 = arith.mulf %235, %236 : vector<8x16xf32>
    %cst_72 = arith.constant 0.000000e+00 : f32
    %238 = vector.broadcast %cst_72 : f32 to vector<1x1xf32>
    %239 = arith.cmpf ogt, %84, %238 : vector<1x1xf32>
    %240 = arith.extui %239 : vector<1x1xi1> to vector<1x1xi32>
    %241 = arith.sitofp %240 : vector<1x1xi32> to vector<1x1xf32>
    %242 = vector.shape_cast %237 : vector<8x16xf32> to vector<1x8x16xf32>
    %cst_73 = arith.constant dense<0.000000e+00> : vector<1xf32>
    %243 = vector.multi_reduction <add>, %242, %cst_73 [1, 2] : vector<1x8x16xf32> to vector<1xf32>
    %244 = vector.shape_cast %243 : vector<1xf32> to vector<1x1x1xf32>
    %245 = vector.extract %244[0, 0, 0] : f32 from vector<1x1x1xf32>
    %246 = vector.broadcast %245 : f32 to vector<1x1xf32>
    %cst_74 = arith.constant 1.000000e+00 : f32
    %247 = vector.broadcast %cst_74 : f32 to vector<1x1xf32>
    %248 = arith.maximumf %84, %247 : vector<1x1xf32>
    %249 = arith.divf %246, %248 : vector<1x1xf32>
    %250 = arith.mulf %249, %241 : vector<1x1xf32>
    %251 = tpu.iota {dimensions = array<i32: 1>} : vector<8x128xi32>
    %252 = tpu.iota {dimensions = array<i32: 0>} : vector<8x128xi32>
    %cst_75 = arith.constant 1.000000e+00 : f32
    %253 = vector.broadcast %cst_75 : f32 to vector<1x1xf32>
    %254 = arith.mulf %36, %253 : vector<1x1xf32>
    %c0_i32 = arith.constant 0 : i32
    %255 = vector.broadcast %c0_i32 : i32 to vector<8x128xi32>
    %256 = arith.cmpi eq, %252, %255 : vector<8x128xi32>
    %c0_i32_76 = arith.constant 0 : i32
    %257 = vector.broadcast %c0_i32_76 : i32 to vector<8x128xi32>
    %258 = arith.cmpi eq, %251, %257 : vector<8x128xi32>
    %259 = arith.andi %256, %258 : vector<8x128xi1>
    %260 = vector.shape_cast %254 : vector<1x1xf32> to vector<1x1xf32>
    %261 = vector.broadcast %260 : vector<1x1xf32> to vector<8x128xf32>
    %cst_77 = arith.constant 0.000000e+00 : f32
    %262 = vector.broadcast %cst_77 : f32 to vector<8x128xf32>
    %263 = arith.select %259, %261, %262 : vector<8x128xi1>, vector<8x128xf32>
    %cst_78 = arith.constant 5.000000e+00 : f32
    %264 = vector.broadcast %cst_78 : f32 to vector<1x1xf32>
    %265 = arith.mulf %195, %264 : vector<1x1xf32>
    %c0_i32_79 = arith.constant 0 : i32
    %266 = vector.broadcast %c0_i32_79 : i32 to vector<8x128xi32>
    %267 = arith.cmpi eq, %252, %266 : vector<8x128xi32>
    %c1_i32 = arith.constant 1 : i32
    %268 = vector.broadcast %c1_i32 : i32 to vector<8x128xi32>
    %269 = arith.cmpi eq, %251, %268 : vector<8x128xi32>
    %270 = arith.andi %267, %269 : vector<8x128xi1>
    %271 = vector.shape_cast %265 : vector<1x1xf32> to vector<1x1xf32>
    %272 = vector.broadcast %271 : vector<1x1xf32> to vector<8x128xf32>
    %cst_80 = arith.constant 0.000000e+00 : f32
    %273 = vector.broadcast %cst_80 : f32 to vector<8x128xf32>
    %274 = arith.select %270, %272, %273 : vector<8x128xi1>, vector<8x128xf32>
    %275 = arith.addf %263, %274 : vector<8x128xf32>
    %cst_81 = arith.constant 2.000000e+00 : f32
    %276 = vector.broadcast %cst_81 : f32 to vector<1x1xf32>
    %277 = arith.mulf %196, %276 : vector<1x1xf32>
    %c0_i32_82 = arith.constant 0 : i32
    %278 = vector.broadcast %c0_i32_82 : i32 to vector<8x128xi32>
    %279 = arith.cmpi eq, %252, %278 : vector<8x128xi32>
    %c2_i32 = arith.constant 2 : i32
    %280 = vector.broadcast %c2_i32 : i32 to vector<8x128xi32>
    %281 = arith.cmpi eq, %251, %280 : vector<8x128xi32>
    %282 = arith.andi %279, %281 : vector<8x128xi1>
    %283 = vector.shape_cast %277 : vector<1x1xf32> to vector<1x1xf32>
    %284 = vector.broadcast %283 : vector<1x1xf32> to vector<8x128xf32>
    %cst_83 = arith.constant 0.000000e+00 : f32
    %285 = vector.broadcast %cst_83 : f32 to vector<8x128xf32>
    %286 = arith.select %282, %284, %285 : vector<8x128xi1>, vector<8x128xf32>
    %287 = arith.addf %275, %286 : vector<8x128xf32>
    %cst_84 = arith.constant 1.000000e+00 : f32
    %288 = vector.broadcast %cst_84 : f32 to vector<1x1xf32>
    %289 = arith.mulf %250, %288 : vector<1x1xf32>
    %c0_i32_85 = arith.constant 0 : i32
    %290 = vector.broadcast %c0_i32_85 : i32 to vector<8x128xi32>
    %291 = arith.cmpi eq, %252, %290 : vector<8x128xi32>
    %c3_i32 = arith.constant 3 : i32
    %292 = vector.broadcast %c3_i32 : i32 to vector<8x128xi32>
    %293 = arith.cmpi eq, %251, %292 : vector<8x128xi32>
    %294 = arith.andi %291, %293 : vector<8x128xi1>
    %295 = vector.shape_cast %289 : vector<1x1xf32> to vector<1x1xf32>
    %296 = vector.broadcast %295 : vector<1x1xf32> to vector<8x128xf32>
    %cst_86 = arith.constant 0.000000e+00 : f32
    %297 = vector.broadcast %cst_86 : f32 to vector<8x128xf32>
    %298 = arith.select %294, %296, %297 : vector<8x128xi1>, vector<8x128xf32>
    %299 = arith.addf %287, %298 : vector<8x128xf32>
    %c0_87 = arith.constant 0 : index
    %c0_88 = arith.constant 0 : index
    %300 = vector.load %arg7[%c0_87, %c0_88] : memref<8x128xf32, #tpu.memory_space<vmem>>, vector<8x128xf32>
    tpu.vector_store %arg7[%c0_87, %c0_88], %299 {strides = array<i32>} : memref<8x128xf32, #tpu.memory_space<vmem>>, vector<8x128xf32>,
    return
  }
  func.func @transform_0(%arg0: i32, %arg1: memref<3x8xi32, #tpu.memory_space<smem>>) -> (i32, i32) {
    %c0_i32 = arith.constant 0 : i32
    %c0_i32_0 = arith.constant 0 : i32
    return %arg0, %c0_i32 : i32, i32
  }
  func.func @transform_1(%arg0: i32, %arg1: memref<3x8xi32, #tpu.memory_space<smem>>) -> (i32, i32) {
    %c0_i32 = arith.constant 0 : i32
    %c0_i32_0 = arith.constant 0 : i32
    return %arg0, %c0_i32 : i32, i32
  }
  func.func @transform_2(%arg0: i32, %arg1: memref<3x8xi32, #tpu.memory_space<smem>>) -> (i32, i32) {
    %c0_i32 = arith.constant 0 : i32
    %c0_i32_0 = arith.constant 0 : i32
    %c0_i32_1 = arith.constant 0 : i32
    return %c0_i32, %c0_i32_0 : i32, i32
  }
  func.func @transform_3(%arg0: i32, %arg1: memref<3x8xi32, #tpu.memory_space<smem>>) -> (i32, i32) {
    %c0_i32 = arith.constant 0 : i32
    %c0_i32_0 = arith.constant 0 : i32
    return %arg0, %c0_i32 : i32, i32
  }
  func.func @transform_4(%arg0: i32, %arg1: memref<3x8xi32, #tpu.memory_space<smem>>) -> (i32, i32) {
    %c0_i32 = arith.constant 0 : i32
    %c0_i32_0 = arith.constant 0 : i32
    return %arg0, %c0_i32 : i32, i32
  }
  func.func @transform_5(%arg0: i32, %arg1: memref<3x8xi32, #tpu.memory_space<smem>>) -> (i32, i32) {
    %c0_i32 = arith.constant 0 : i32
    %c0_i32_0 = arith.constant 0 : i32
    return %arg0, %c0_i32 : i32, i32
  }
}

</mosaic_0001>

<llo_original>
// kernel: tpu_custom_call.1
$region0: #{tpu_custom_call.1}
  #allocation0 [shape = 'u32[]', space=smem, size = 0x4, offset = 0x4, fixed_abs, tag = 'smem constant byte address 0x4 - core index']
  #allocation1 [shape = 'u32[144,128]{1,0:T(1,128)}', space=vmem, size = 0x12000, scoped, tag = 'internal scratch']
  #allocation2 [shape = 'f32[8,20]{1,0:T(8,128)}', space=vmem, size = 0x1000, scoped, tag = 'scratch operand']
  #allocation3 [shape = 's32[1]{0}', space=sflag, size = 0x4, scoped, tag = 'scoped memory for tpu_custom_call.1']
  #allocation4 [shape = 'u8[2048]{0}', space=smem, size = 0x800, scoped, tag = 'prefetched SMEM operand 0']
  %s0 = inlined_call_operand.vmem [shape: s32[3,8], index: 0, kind: input, shape index: {}]
  %s1 = inlined_call_operand.vmem [shape: f32[48,9], index: 1, kind: input, shape index: {}]
  %s2 = inlined_call_operand.vmem [shape: s32[48,1], index: 2, kind: input, shape index: {}]
  %s3 = inlined_call_operand.vmem [shape: f32[1,9], index: 3, kind: input, shape index: {}]
  %s4 = inlined_call_operand.vmem [shape: f32[48,20], index: 4, kind: input, shape index: {}]
  %s5 = inlined_call_operand.vmem [shape: f32[24,21], index: 5, kind: input, shape index: {}]
  %s6 = inlined_call_operand.hbm [shape: f32[24,128], index: 6, kind: output, shape index: {}]
  %s7 = sld [smem:[#allocation0]]
  $region53: #{tpu_custom_call.1} parent=0
    _
  %s9 = ssub.s32 1, %s7
  %s10 = scalar_select 0, %s9, %s7
  %s11 = sshll.u32 %s0, 4
  %s12 = int_to_ptr.vmem [resolvable:$true] %s11
  %14 = dma.vmem_to_smem %s12, 64, [#allocation4], [#allocation3]
  %15 = dma.done [#allocation3], 64
  %16 = sfence
  $region1: #{tpu_custom_call.1} parent=0
    #allocation5 [shape = 'u8[8192]{0}', space=vmem, size = 0x2000, scoped, tag = 'output window, operand 0']
    #allocation6 [shape = 's32[2]{0}', space=sflag, size = 0x8, scoped, tag = 'scoped memory for tpu_custom_call.1']
    %17 = vsyncpa [#allocation6], 0
    %s18 = scalar_lea.sflag [#allocation6], 1
    %19 = vsyncpa %s18, 0
    loop: start=0, step=1, limit=5
    $region2: #{tpu_custom_call.1} parent=1 // loop_pre_header
      _
    $region3: #{tpu_custom_call.1} parent=1 // loop_header
      %s21 = sphi 0, %s25
      %p22 = scmp.ge.s32.totalorder %s21, 5
      %s31 = sphi 0, %s33
      %s34 = sphi 0, %s31
      %s35 = sphi 0, %s34
      %s51 = sphi 0, %s35
      %s57 = sphi 0, %s59
      %s60 = sphi 0, %s57
      %s61 = sphi 0, %s60
      %s77 = sphi 0, %s61
      %s81 = sphi 0, %s81
      %s83 = sphi 0, %s81
      %s84 = sphi 0, %s83
      %s98 = sphi 0, %s84
      %s104 = sphi 0, %s106
      %s107 = sphi 0, %s104
      %s108 = sphi 0, %s107
      %s124 = sphi 0, %s108
      %s130 = sphi 0, %s132
      %s133 = sphi 0, %s130
      %s134 = sphi 0, %s133
      %s150 = sphi 0, %s134
      %s156 = sphi 0, %s158
      %s159 = sphi 0, %s156
      %s160 = sphi 0, %s159
      %s176 = sphi 0, %s160
    $region4: #{tpu_custom_call.1} parent=1 // loop_header_branch
      %24 = sbr.rel (%p22) target = $region8
    $region5: #{tpu_custom_call.1} parent=1 // loop_body
      %s26 = ssub.s32 %s21, 1
      %s27 = ssub.s32 %s21, 2
      %s28 = sadd.s32 %s21, 1
      %s29 = ssub.s32 %s21, %s28
      %p30 = scmp.eq.s32.totalorder %s29, 0
      %s32 = sadd.s32 %s31, 1
      %s33 = scalar_select %p30, %s31, %s32
      %p36 = pneg %p30
      %p37 = scmp.eq.s32.totalorder %s21, 2
      %p38 = por %p36, %p37
      %p39 = scmp.ne.s32.totalorder %s31, %s34
      %p40 = scmp.eq.s32.totalorder %s21, 0
      %p41 = por %p39, %p40
      %p42 = scmp.ne.s32.totalorder %s31, %s34
      %p43 = scmp.eq.s32.totalorder %s26, 2
      %p44 = por %p42, %p43
      %p45 = scmp.ne.s32.totalorder %s34, %s35
      %p46 = scmp.eq.s32.totalorder %s26, 0
      %p47 = por %p45, %p46
      %p48 = scmp.ne.s32.totalorder %s34, %s35
      %p49 = scmp.eq.s32.totalorder %s27, 2
      %p50 = por %p48, %p49
      %p52 = scmp.ne.s32.totalorder %s35, %s51
      %p53 = scmp.eq.s32.totalorder %s27, 0
      %p54 = por %p52, %p53
      %s55 = ssub.s32 %s21, %s28
      %p56 = scmp.eq.s32.totalorder %s55, 0
      %s58 = sadd.s32 %s57, 1
      %s59 = scalar_select %p56, %s57, %s58
      %p62 = pneg %p56
      %p63 = scmp.eq.s32.totalorder %s21, 2
      %p64 = por %p62, %p63
      %p65 = scmp.ne.s32.totalorder %s57, %s60
      %p66 = scmp.eq.s32.totalorder %s21, 0
      %p67 = por %p65, %p66
      %p68 = scmp.ne.s32.totalorder %s57, %s60
      %p69 = scmp.eq.s32.totalorder %s26, 2
      %p70 = por %p68, %p69
      %p71 = scmp.ne.s32.totalorder %s60, %s61
      %p72 = scmp.eq.s32.totalorder %s26, 0
      %p73 = por %p71, %p72
      %p74 = scmp.ne.s32.totalorder %s60, %s61
      %p75 = scmp.eq.s32.totalorder %s27, 2
      %p76 = por %p74, %p75
      %p78 = scmp.ne.s32.totalorder %s61, %s77
      %p79 = scmp.eq.s32.totalorder %s27, 0
      %p80 = por %p78, %p79
      %s82 = sadd.s32 %s81, 1
      %p85 = scmp.eq.s32.totalorder %s21, 2
      %p86 = scmp.ne.s32.totalorder %s81, %s83
      %p87 = scmp.eq.s32.totalorder %s21, 0
      %p88 = por %p86, %p87
      %p89 = scmp.ne.s32.totalorder %s81, %s83
      %p90 = scmp.eq.s32.totalorder %s26, 2
      %p91 = por %p89, %p90
      %p92 = scmp.ne.s32.totalorder %s83, %s84
      %p93 = scmp.eq.s32.totalorder %s26, 0
      %p94 = por %p92, %p93
      %p95 = scmp.ne.s32.totalorder %s83, %s84
      %p96 = scmp.eq.s32.totalorder %s27, 2
      %p97 = por %p95, %p96
      %p99 = scmp.ne.s32.totalorder %s84, %s98
      %p100 = scmp.eq.s32.totalorder %s27, 0
      %p101 = por %p99, %p100
      %s102 = ssub.s32 %s21, %s28
      %p103 = scmp.eq.s32.totalorder %s102, 0
      %s105 = sadd.s32 %s104, 1
      %s106 = scalar_select %p103, %s104, %s105
      %p109 = pneg %p103
      %p110 = scmp.eq.s32.totalorder %s21, 2
      %p111 = por %p109, %p110
      %p112 = scmp.ne.s32.totalorder %s104, %s107
      %p113 = scmp.eq.s32.totalorder %s21, 0
      %p114 = por %p112, %p113
      %p115 = scmp.ne.s32.totalorder %s104, %s107
      %p116 = scmp.eq.s32.totalorder %s26, 2
      %p117 = por %p115, %p116
      %p118 = scmp.ne.s32.totalorder %s107, %s108
      %p119 = scmp.eq.s32.totalorder %s26, 0
      %p120 = por %p118, %p119
      %p121 = scmp.ne.s32.totalorder %s107, %s108
      %p122 = scmp.eq.s32.totalorder %s27, 2
      %p123 = por %p121, %p122
      %p125 = scmp.ne.s32.totalorder %s108, %s124
      %p126 = scmp.eq.s32.totalorder %s27, 0
      %p127 = por %p125, %p126
      %s128 = ssub.s32 %s21, %s28
      %p129 = scmp.eq.s32.totalorder %s128, 0
      %s131 = sadd.s32 %s130, 1
      %s132 = scalar_select %p129, %s130, %s131
      %p135 = pneg %p129
      %p136 = scmp.eq.s32.totalorder %s21, 2
      %p137 = por %p135, %p136
      %p138 = scmp.ne.s32.totalorder %s130, %s133
      %p139 = scmp.eq.s32.totalorder %s21, 0
      %p140 = por %p138, %p139
      %p141 = scmp.ne.s32.totalorder %s130, %s133
      %p142 = scmp.eq.s32.totalorder %s26, 2
      %p143 = por %p141, %p142
      %p144 = scmp.ne.s32.totalorder %s133, %s134
      %p145 = scmp.eq.s32.totalorder %s26, 0
      %p146 = por %p144, %p145
      %p147 = scmp.ne.s32.totalorder %s133, %s134
      %p148 = scmp.eq.s32.totalorder %s27, 2
      %p149 = por %p147, %p148
      %p151 = scmp.ne.s32.totalorder %s134, %s150
      %p152 = scmp.eq.s32.totalorder %s27, 0
      %p153 = por %p151, %p152
      %s154 = ssub.s32 %s21, %s28
      %p155 = scmp.eq.s32.totalorder %s154, 0
      %s157 = sadd.s32 %s156, 1
      %s158 = scalar_select %p155, %s156, %s157
      %p161 = pneg %p155
      %p162 = scmp.eq.s32.totalorder %s21, 2
      %p163 = por %p161, %p162
      %p164 = scmp.ne.s32.totalorder %s156, %s159
      %p165 = scmp.eq.s32.totalorder %s21, 0
      %p166 = por %p164, %p165
      %p167 = scmp.ne.s32.totalorder %s156, %s159
      %p168 = scmp.eq.s32.totalorder %s26, 2
      %p169 = por %p167, %p168
      %p170 = scmp.ne.s32.totalorder %s159, %s160
      %p171 = scmp.eq.s32.totalorder %s26, 0
      %p172 = por %p170, %p171
      %p173 = scmp.ne.s32.totalorder %s159, %s160
      %p174 = scmp.eq.s32.totalorder %s27, 2
      %p175 = por %p173, %p174
      %p177 = scmp.ne.s32.totalorder %s160, %s176
      %p178 = scmp.eq.s32.totalorder %s27, 0
      %p179 = por %p177, %p178
      %p180 = scmp.le.s32.totalorder 1, %s21
      %p181 = scmp.lt.s32.totalorder %s21, 4
      %p182 = pnand %p180, %p181
      %p183 = pneg %p182
      // Predicated region
      $region9: #{tpu_custom_call.1} parent=5 // pred_check
        _
      $region10: #{tpu_custom_call.1} parent=5 // pred_check_branch
        %185 = sbr.rel (%p182) target = $region12
      $region11: #{tpu_custom_call.1} parent=5 // pred_region
        %s186 = ssub.s32 %s21, 1
        // Predicated region
        $region13: #{tpu_custom_call.1} parent=11 // pred_check
          %p187 = pneg %p94
        $region14: #{tpu_custom_call.1} parent=11 // pred_check_branch
          %189 = sbr.rel (%p187) target = $region16
        $region15: #{tpu_custom_call.1} parent=11 // pred_region
          _
        $region16: #{tpu_custom_call.1} parent=11 // pred_fallthru
          _
      $region12: #{tpu_custom_call.1} parent=5 // pred_fallthru
        _
      %p190 = scmp.lt.s32.totalorder %s21, 3
      // Predicated region
      $region17: #{tpu_custom_call.1} parent=5 // pred_check
        %p191 = pneg %p190
      $region18: #{tpu_custom_call.1} parent=5 // pred_check_branch
        %193 = sbr.rel (%p191) target = $region20
      $region19: #{tpu_custom_call.1} parent=5 // pred_region
        // Predicated region
        $region21: #{tpu_custom_call.1} parent=19 // pred_check
          %p194 = pneg %p41
        $region22: #{tpu_custom_call.1} parent=19 // pred_check_branch
          %196 = sbr.rel (%p194) target = $region24
        $region23: #{tpu_custom_call.1} parent=19 // pred_region
          %s197 = smul.u32 2, %s21
          %p198 = scmp.lt.s32.totalorder %s197, 5
          %s199 = scalar_select %p198, %s197, 5
          %s200 = smul.addr %s199, 8
          %s201 = scalar_lea.vmem %s1, %s200
          %s202 = smul.u32 2, %s21
        $region24: #{tpu_custom_call.1} parent=19 // pred_fallthru
          _
        // Predicated region
        $region25: #{tpu_custom_call.1} parent=19 // pred_check
          %p203 = pneg %p67
        $region26: #{tpu_custom_call.1} parent=19 // pred_check_branch
          %205 = sbr.rel (%p203) target = $region28
        $region27: #{tpu_custom_call.1} parent=19 // pred_region
          %s206 = smul.u32 2, %s21
          %p207 = scmp.lt.s32.totalorder %s206, 5
          %s208 = scalar_select %p207, %s206, 5
          %s209 = smul.addr %s208, 8
          %s210 = scalar_lea.vmem %s2, %s209
          %s211 = smul.u32 2, %s21
        $region28: #{tpu_custom_call.1} parent=19 // pred_fallthru
          _
        // Predicated region
        $region29: #{tpu_custom_call.1} parent=19 // pred_check
          %p212 = pneg %p114
        $region30: #{tpu_custom_call.1} parent=19 // pred_check_branch
          %214 = sbr.rel (%p212) target = $region32
        $region31: #{tpu_custom_call.1} parent=19 // pred_region
          %s215 = smul.u32 2, %s21
          %p216 = scmp.lt.s32.totalorder %s215, 5
          %s217 = scalar_select %p216, %s215, 5
          %s218 = smul.addr %s217, 8
          %s219 = scalar_lea.vmem %s4, %s218
          %s220 = smul.u32 2, %s21
        $region32: #{tpu_custom_call.1} parent=19 // pred_fallthru
          _
        // Predicated region
        $region33: #{tpu_custom_call.1} parent=19 // pred_check
          %p221 = pneg %p140
        $region34: #{tpu_custom_call.1} parent=19 // pred_check_branch
          %223 = sbr.rel (%p221) target = $region36
        $region35: #{tpu_custom_call.1} parent=19 // pred_region
          %p224 = scmp.lt.s32.totalorder %s21, 2
          %s225 = scalar_select %p224, %s21, 2
          %s226 = smul.addr %s225, 8
          %s227 = scalar_lea.vmem %s5, %s226
        $region36: #{tpu_custom_call.1} parent=19 // pred_fallthru
          _
      $region20: #{tpu_custom_call.1} parent=5 // pred_fallthru
        _
      %p228 = scmp.le.s32.totalorder 1, %s21
      %p229 = scmp.lt.s32.totalorder %s21, 4
      %p230 = pnand %p228, %p229
      %p231 = pneg %p230
      // Predicated region
      $region37: #{tpu_custom_call.1} parent=5 // pred_check
        _
      $region38: #{tpu_custom_call.1} parent=5 // pred_check_branch
        %233 = sbr.rel (%p230) target = $region40
      $region39: #{tpu_custom_call.1} parent=5 // pred_region
        %s234 = ssub.s32 %s21, 1
        %s235 = smul.u32 2, %s26
        %p236 = scmp.lt.s32.totalorder %s235, 5
        %s237 = scalar_select %p236, %s235, 5
        %s238 = smul.addr %s237, 8
        %s239 = scalar_lea.vmem %s1, %s238
        %p240 = pneg %p47
        %p241 = pneg %p44
        %s242 = smul.u32 2, %s26
        %p243 = scmp.lt.s32.totalorder %s242, 5
        %s244 = scalar_select %p243, %s242, 5
        %s245 = smul.addr %s244, 8
        %s246 = scalar_lea.vmem %s2, %s245
        %p247 = pneg %p73
        %p248 = pneg %p70
        %p249 = pneg %p94
        %p250 = pneg %p91
        %s251 = smul.u32 2, %s26
        %p252 = scmp.lt.s32.totalorder %s251, 5
        %s253 = scalar_select %p252, %s251, 5
        %s254 = smul.addr %s253, 8
        %s255 = scalar_lea.vmem %s4, %s254
        %p256 = pneg %p120
        %p257 = pneg %p117
        %p258 = scmp.lt.s32.totalorder %s26, 2
        %s259 = scalar_select %p258, %s26, 2
        %s260 = smul.addr %s259, 8
        %s261 = scalar_lea.vmem %s5, %s260
        %p262 = pneg %p146
        %p263 = pneg %p143
        %p264 = pneg %p172
        %p265 = pneg %p169
        %s266 = sand.u32 %s159, 1
        %s267 = scalar_lea.sflag [#allocation6], %s266
        %s268 = sand.u32 %s159, 1
        %s269 = smul.addr %s268, 8
        %s270 = scalar_lea.vmem [#allocation5], %s269
        %s271 = smul.u32 2, %s26
        %p272 = scmp.lt.s32.totalorder %s271, 5
        %s273 = scalar_select %p272, %s271, 5
        %s274 = smul.addr %s273, 8
        %s275 = scalar_lea.vmem %s1, %s274
        %s276 = smul.u32 2, %s26
        %s277 = smul.u32 2, %s26
        %p278 = scmp.lt.s32.totalorder %s277, 5
        %s279 = scalar_select %p278, %s277, 5
        %s280 = smul.addr %s279, 8
        %s281 = scalar_lea.vmem %s2, %s280
        %s282 = smul.u32 2, %s26
        %s283 = smul.u32 2, %s26
        %p284 = scmp.lt.s32.totalorder %s283, 5
        %s285 = scalar_select %p284, %s283, 5
        %s286 = smul.addr %s285, 8
        %s287 = scalar_lea.vmem %s4, %s286
        %s288 = smul.u32 2, %s26
        %p289 = scmp.lt.s32.totalorder %s26, 2
        %s290 = scalar_select %p289, %s26, 2
        %s291 = smul.addr %s290, 8
        %s292 = scalar_lea.vmem %s5, %s291
        %v293 = vld [vmem:[%s275] sm:$0xff]
        %v294 = vld [vmem:[%s275 + $0x8] sm:$0xff]
        %vm295 = vcmask 72704
        %v296 = vsel %vm295, %v293, -inf
        %297 = vmax.xlane.f32.xlu0 %v296
        %v298 = vpop.xlane.xlu0 %297
        %v299 = vsel %vm295, %v294, -inf
        %300 = vmax.xlane.f32.xlu0 %v299
        %v301 = vpop.xlane.xlu0 %300
        %v302 = vsub.f32 %v293, %v298
        %v303 = vsub.f32 %v294, %v301
        %v304 = vmul.f32 %v302, 1.442695
        %v305 = vpow.pop %v304
        %v306 = vmul.f32 %v303, 1.442695
        %v307 = vpow.pop %v306
        %v308 = vsel %vm295, %v305, 0.0
        %309 = vadd.xlane.f32.xlu0 %v308
        %v310 = vpop.xlane.xlu0 %309
        %v311 = vsel %vm295, %v307, 0.0
        %312 = vadd.xlane.f32.xlu0 %v311
        %v313 = vpop.xlane.xlu0 %312
        %v314 = vlog2.pop %v310
        %v315 = vmul.f32 %v314, 0.6931472
        %v316 = vlog2.pop %v313
        %v317 = vmul.f32 %v316, 0.6931472
        %v318 = vadd.f32 %v298, %v315
        %v319 = vadd.f32 %v301, %v317
        %v320 = vlaneseq
        %v321 = vand.u32 %v320, 127
        %v322 = vld [vmem:[%s281] sm:$0xff]
        %v323 = vld [vmem:[%s281 + $0x8] sm:$0xff]
        %324 = vset.pattern.permute.xlu0 0
        %325 = vperm.xlu0 %324, %v322
        %v326 = vpop.permute.xlu0 %325
        %327 = vset.pattern.permute.xlu0 0
        %328 = vperm.xlu0 %327, %v323
        %v329 = vpop.permute.xlu0 %328
        %vm330 = vcmp.eq.s32.totalorder %v321, %v326
        %vm331 = vcmp.eq.s32.totalorder %v321, %v329
        %v332 = vsel %vm330, 1, 0
        %v333 = vsel %vm331, 1, 0
        %v334 = vcvt.s32.f32 %v332
        %v335 = vcvt.s32.f32 %v333
        %v336 = vmul.f32 %v334, %v293
        %v337 = vmul.f32 %v335, %v294
        %v338 = vsel %vm295, %v336, 0.0
        %339 = vadd.xlane.f32.xlu0 %v338
        %v340 = vpop.xlane.xlu0 %339
        %v341 = vsel %vm295, %v337, 0.0
        %342 = vadd.xlane.f32.xlu0 %v341
        %v343 = vpop.xlane.xlu0 %342
        %v344 = vsub.f32 %v318, %v340
        %v345 = vsub.f32 %v319, %v343
        %v346 = vld [vmem:[%s3] sm:$0x1]
        %v348 = vlaneseq
        %v349 = vshrl.u32 %v348, 7
        %v350 = vsub.s32 0, %v349
        %v351 = vrot.slane %v346, %v350
        %v353 = vmul.f32 %v334, %v351
        %v354 = vmul.f32 %v335, %v351
        %v355 = vsel %vm295, %v353, 0.0
        %356 = vadd.xlane.f32.xlu0 %v355
        %v357 = vpop.xlane.xlu0 %356
        %v358 = vsel %vm295, %v354, 0.0
        %359 = vadd.xlane.f32.xlu0 %v358
        %v360 = vpop.xlane.xlu0 %359
        %v361 = vmul.f32 %v357, %v344
        %v362 = vmul.f32 %v360, %v345
        %vm363 = vcmask 7168
        %v364 = vsel %vm363, %v361, 0.0
        %v365 = vsel %vm363, %v362, 0.0
        %v366 = vadd.f32 %v364, %v365
        %367 = vadd.xlane.f32.xlu0 %v366
        %v368 = vpop.xlane.xlu0 %367
        %v369 = vrot.slane %v368, 4
        %v370 = vadd.f32 %v368, %v369
        %v371 = vrot.slane %v370, 2
        %v372 = vadd.f32 %v370, %v371
        %v373 = vrot.slane %v372, 1
        %v374 = vadd.f32 %v372, %v373
        %s375 = vtos %v374
        %v376 = vstv %s375
        %v377 = vsel %vm363, %v357, 0.0
        %v378 = vsel %vm363, %v360, 0.0
        %v379 = vadd.f32 %v377, %v378
        %380 = vadd.xlane.f32.xlu0 %v379
        %v381 = vpop.xlane.xlu0 %380
        %v382 = vrot.slane %v381, 4
        %v383 = vadd.f32 %v381, %v382
        %v384 = vrot.slane %v383, 2
        %v385 = vadd.f32 %v383, %v384
        %v386 = vrot.slane %v385, 1
        %v387 = vadd.f32 %v385, %v386
        %s388 = vtos %v387
        %v389 = vstv %s388
        %v390 = vrcp.pop %v389
        %v391 = vmul.f32 %v376, %v390
        %s392 = smul.u32 %s26, 128
        %s393 = sld [smem:[#allocation4 + %s392]]
        %s394 = scalar_lea.vmem %s287, %s393
        %v395 = vld [vmem:[%s394] sm:$0x1]
        %vm396 = vcmask 155648
        %397 = vst.msk [vmem:[#allocation2] sm:$0x1] %vm396, %v395
        %s398 = sadd.s32 %s392, 1
        %s399 = sld [smem:[#allocation4 + %s398]]
        %s400 = scalar_lea.vmem %s287, %s399
        %v401 = vld [vmem:[%s400] sm:$0x1]
        %402 = vst.msk [vmem:[#allocation2 + $0x1] sm:$0x1] %vm396, %v401
        %s403 = sadd.s32 %s392, 2
        %s404 = sld [smem:[#allocation4 + %s403]]
        %s405 = scalar_lea.vmem %s287, %s404
        %v406 = vld [vmem:[%s405] sm:$0x1]
        %407 = vst.msk [vmem:[#allocation2 + $0x2] sm:$0x1] %vm396, %v406
        %s408 = sadd.s32 %s392, 3
        %s409 = sld [smem:[#allocation4 + %s408]]
        %s410 = scalar_lea.vmem %s287, %s409
        %v411 = vld [vmem:[%s410] sm:$0x1]
        %412 = vst.msk [vmem:[#allocation2 + $0x3] sm:$0x1] %vm396, %v411
        %s413 = sadd.s32 %s392, 4
        %s414 = sld [smem:[#allocation4 + %s413]]
        %s415 = scalar_lea.vmem %s287, %s414
        %v416 = vld [vmem:[%s415] sm:$0x1]
        %417 = vst.msk [vmem:[#allocation2 + $0x4] sm:$0x1] %vm396, %v416
        %s418 = sadd.s32 %s392, 5
        %s419 = sld [smem:[#allocation4 + %s418]]
        %s420 = scalar_lea.vmem %s287, %s419
        %v421 = vld [vmem:[%s420] sm:$0x1]
        %422 = vst.msk [vmem:[#allocation2 + $0x5] sm:$0x1] %vm396, %v421
        %s423 = sadd.s32 %s392, 6
        %s424 = sld [smem:[#allocation4 + %s423]]
        %s425 = scalar_lea.vmem %s287, %s424
        %v426 = vld [vmem:[%s425] sm:$0x1]
        %427 = vst.msk [vmem:[#allocation2 + $0x6] sm:$0x1] %vm396, %v426
        %s428 = sadd.s32 %s392, 7
        %s429 = sld [smem:[#allocation4 + %s428]]
        %s430 = scalar_lea.vmem %s287, %s429
        %v431 = vld [vmem:[%s430] sm:$0x1]
        %432 = vst.msk [vmem:[#allocation2 + $0x7] sm:$0x1] %vm396, %v431
        %v433 = vld [vmem:[#allocation2] sm:$0xff]
        %v434 = vld [vmem:[%s292] sm:$0xff]
        %436 = vrot.lane.b32.xlu0 %v434, 108
        %v437 = vpop.permute.xlu0 %436
        %v439 = vsel %vm363, %v437, 0.0
        %440 = vadd.xlane.f32.xlu0 %v439
        %v441 = vpop.xlane.xlu0 %440
        %v442 = vrot.slane %v441, 4
        %v443 = vadd.f32 %v441, %v442
        %v444 = vrot.slane %v443, 2
        %v445 = vadd.f32 %v443, %v444
        %v446 = vrot.slane %v445, 1
        %v447 = vadd.f32 %v445, %v446
        %s448 = vtos %v447
        %v449 = vstv %s448
        %450 = vrot.lane.b32.xlu0 %v434, 127
        %v451 = vpop.permute.xlu0 %450
        %v453 = vmul.f32 %v434, %v451
        %vm454 = vcmp.gt.f32.partialorder %v453, 0.0
        %v455 = vsel %vm454, 1, 0
        %v456 = vcvt.s32.f32 %v455
        %457 = vrot.lane.b32.xlu0 %v434, 110
        %v458 = vpop.permute.xlu0 %457
        %v460 = vmul.f32 %v456, %v458
        %462 = vrot.lane.b32.xlu0 %v460, 126
        %v463 = vpop.permute.xlu0 %462
        %v465 = vsel %vm363, %v463, 0.0
        %466 = vadd.xlane.f32.xlu0 %v465
        %v467 = vpop.xlane.xlu0 %466
        %v468 = vrot.slane %v467, 4
        %v469 = vadd.f32 %v467, %v468
        %v470 = vrot.slane %v469, 2
        %v471 = vadd.f32 %v469, %v470
        %v472 = vrot.slane %v471, 1
        %v473 = vadd.f32 %v471, %v472
        %s474 = vtos %v473
        %v475 = vstv %s474
        %v476 = vsub.f32 %v433, %v434
        %v477 = vand.u32 2147483647, %v476
        %478 = vset.pattern.permute.xlu0 2
        %479 = vperm.xlu0 %478, %v460
        %v480 = vpop.permute.xlu0 %479
        %v482 = vmul.f32 %v477, %v480
        %vm483 = vcmask 31744
        %v484 = vsel %vm483, %v482, 0.0
        %485 = vadd.xlane.f32.xlu0 %v484
        %v486 = vpop.xlane.xlu0 %485
        %v487 = vrot.slane %v486, 4
        %v488 = vadd.f32 %v486, %v487
        %v489 = vrot.slane %v488, 2
        %v490 = vadd.f32 %v488, %v489
        %v491 = vrot.slane %v490, 1
        %v492 = vadd.f32 %v490, %v491
        %s493 = vtos %v492
        %v494 = vstv %s493
        %v495 = vmul.f32 %v475, 4.0
        %v496 = vmax.f32 %v495, 1.0
        %v497 = vrcp.pop %v496
        %v498 = vmul.f32 %v494, %v497
        %v499 = vmul.f32 %v433, 0.5
        %501 = vrot.lane.b32.xlu0 %v499, 126
        %v502 = vpop.permute.xlu0 %501
        %v504 = vsub.f32 %v433, %v502
        %v505 = vadd.f32 %v433, %v502
        %v506 = vmul.f32 %v434, 0.5
        %508 = vrot.lane.b32.xlu0 %v506, 126
        %v509 = vpop.permute.xlu0 %508
        %v511 = vsub.f32 %v434, %v509
        %v512 = vadd.f32 %v434, %v509
        %v513 = vsub.f32 %v505, %v504
        %515 = vrot.lane.b32.xlu0 %v513, 127
        %v516 = vpop.permute.xlu0 %515
        %v518 = vmul.f32 %v513, %v516
        %v519 = vsub.f32 %v512, %v511
        %521 = vrot.lane.b32.xlu0 %v519, 127
        %v522 = vpop.permute.xlu0 %521
        %v524 = vmul.f32 %v519, %v522
        %v525 = vmin.f32 %v505, %v512
        %v526 = vmax.f32 %v504, %v511
        %v527 = vsub.f32 %v525, %v526
        %v528 = vmax.f32 %v527, 0.0
        %530 = vrot.lane.b32.xlu0 %v528, 127
        %v531 = vpop.permute.xlu0 %530
        %v533 = vmul.f32 %v528, %v531
        %v534 = vadd.f32 %v518, %v524
        %v535 = vsub.f32 %v534, %v533
        %v536 = vmax.f32 %v535, 1e-09
        %v537 = vrcp.pop %v536
        %v538 = vmul.f32 %v533, %v537
        %v539 = vmax.f32 %v505, %v512
        %v540 = vmin.f32 %v504, %v511
        %v541 = vsub.f32 %v539, %v540
        %543 = vrot.lane.b32.xlu0 %v541, 127
        %v544 = vpop.permute.xlu0 %543
        %v546 = vmul.f32 %v541, %v544
        %v547 = vsub.f32 %v546, %v535
        %v548 = vmax.f32 %v546, 1e-09
        %v549 = vrcp.pop %v548
        %v550 = vmul.f32 %v547, %v549
        %v551 = vsub.f32 %v538, %v550
        %v552 = vsub.f32 1.0, %v551
        %v553 = vmul.f32 %v552, %v463
        %v554 = vsel %vm363, %v553, 0.0
        %555 = vadd.xlane.f32.xlu0 %v554
        %v556 = vpop.xlane.xlu0 %555
        %v557 = vrot.slane %v556, 4
        %v558 = vadd.f32 %v556, %v557
        %v559 = vrot.slane %v558, 2
        %v560 = vadd.f32 %v558, %v559
        %v561 = vrot.slane %v560, 1
        %v562 = vadd.f32 %v560, %v561
        %s563 = vtos %v562
        %v564 = vstv %s563
        %v565 = vmax.f32 %v475, 1.0
        %v566 = vrcp.pop %v565
        %v567 = vmul.f32 %v564, %v566
        %vm568 = vcmp.gt.f32.partialorder %v475, 0.0
        %v569 = vsel %vm568, 1, 0
        %v570 = vcvt.s32.f32 %v569
        %v571 = vmul.f32 %v498, %v570
        %v572 = vmul.f32 %v567, %v570
        %v573 = vand.u32 2147483647, %v433
        %v574 = vsub.f32 0.0, %v573
        %v575 = vmul.f32 %v574, 1.442695
        %v576 = vpow.pop %v575
        %v577 = vadd.f32 %v576, 1.0
        %v578 = vrcp.pop %v577
        %vm579 = vcmp.ge.f32.partialorder %v433, 0.0
        %v580 = vsel %vm579, 1.0, %v576
        %v581 = vmul.f32 %v580, %v578
        %v582 = vmax.f32 %v433, 0.0
        %v583 = vmul.f32 %v433, %v434
        %v584 = vsub.f32 %v582, %v583
        %v585 = vadd.f32 %v576, 1.0
        %v586 = vlog2.pop %v585
        %v587 = vmul.f32 %v586, 0.6931472
        %v588 = vmul.f32 -0.5, %v576
        %v589 = vadd.f32 %v588, 1.0
        %v590 = vmul.f32 %v589, %v576
        %v591 = vand.u32 2147483647, %v576
        %vm592 = vcmp.lt.f32.partialorder %v591, 0.0004427343
        %v593 = vsel %vm592, %v590, %v587
        %v594 = vadd.f32 %v584, %v593
        %v595 = vmul.f32 %v581, %v434
        %v596 = vsub.f32 1.0, %v581
        %v597 = vsub.f32 1.0, %v434
        %v598 = vmul.f32 %v596, %v597
        %v599 = vadd.f32 %v595, %v598
        %v600 = vsub.f32 1.0, %v599
        %v601 = vmul.f32 %v600, %v600
        %v602 = vmul.f32 %v434, 0.25
        %v603 = vmul.f32 %v597, 0.75
        %v604 = vadd.f32 %v602, %v603
        %v605 = vmul.f32 %v604, %v594
        %v606 = vmul.f32 %v605, %v601
        %607 = vset.pattern.permute.xlu0 20
        %608 = vperm.xlu0 %607, %v434
        %v609 = vpop.permute.xlu0 %608
        %v611 = vmul.f32 %v606, %v609
        %vm612 = vcmp.gt.f32.partialorder %v449, 0.0
        %v613 = vsel %vm612, 1, 0
        %v614 = vcvt.s32.f32 %v613
        %616 = vrot.lane.b32.xlu0 %v611, 124
        %v617 = vpop.permute.xlu0 %616
        %vm619 = vcmask 130048
        %v620 = vsel %vm619, %v617, 0.0
        %621 = vadd.xlane.f32.xlu0 %v620
        %v622 = vpop.xlane.xlu0 %621
        %v623 = vrot.slane %v622, 4
        %v624 = vadd.f32 %v622, %v623
        %v625 = vrot.slane %v624, 2
        %v626 = vadd.f32 %v624, %v625
        %v627 = vrot.slane %v626, 1
        %v628 = vadd.f32 %v626, %v627
        %s629 = vtos %v628
        %v630 = vstv %s629
        %v631 = vmax.f32 %v449, 1.0
        %v632 = vrcp.pop %v631
        %v633 = vmul.f32 %v630, %v632
        %v634 = vmul.f32 %v633, %v614
        %v635 = vlaneseq
        %v636 = vshrl.u32 %v635, 7
        %vm637 = vcmp.eq.s32.totalorder %v636, 0
        %vm638 = vcmp.eq.s32.totalorder %v321, 0
        %vm639 = vmand %vm637, %vm638
        %v640 = vsel %vm639, %v391, 0.0
        %v641 = vmul.f32 %v571, 5.0
        %vm642 = vcmp.eq.s32.totalorder %v321, 1
        %vm643 = vmand %vm637, %vm642
        %v644 = vsel %vm643, %v641, 0.0
        %v645 = vadd.f32 %v640, %v644
        %v646 = vmul.f32 %v572, 2.0
        %vm647 = vcmp.eq.s32.totalorder %v321, 2
        %vm648 = vmand %vm637, %vm647
        %v649 = vsel %vm648, %v646, 0.0
        %v650 = vadd.f32 %v645, %v649
        %vm651 = vcmp.eq.s32.totalorder %v321, 3
        %vm652 = vmand %vm637, %vm651
        %v653 = vsel %vm652, %v634, 0.0
        %v654 = vadd.f32 %v650, %v653
        %655 = vst [vmem:[%s270] sm:$0xff] %v654
        %s656 = sand.u32 %s159, 1
        %s657 = scalar_lea.sflag [#allocation6], %s656
        %s658 = sand.u32 %s159, 1
        %s659 = smul.addr %s658, 8
        %s660 = scalar_lea.vmem [#allocation5], %s659
        // Predicated region
        $region41: #{tpu_custom_call.1} parent=39 // pred_check
          %p661 = pneg %p169
        $region42: #{tpu_custom_call.1} parent=39 // pred_check_branch
          %663 = sbr.rel (%p661) target = $region44
        $region43: #{tpu_custom_call.1} parent=39 // pred_region
          %s665 = ssub.s32 128, 128
          %666 = vsyncadd %s657, %s665
          %s667 = smul.addr %s26, 128
          %s668 = scalar_lea.hbm %s6, %s667
          %s670 = sshll.u32 %s660, 4
          %s671 = int_to_ptr.vmem [resolvable:$true] %s670
          %673 = dma.vmem_to_hbm [thread:$0]  %s671, 128, %s668, %s657
        $region44: #{tpu_custom_call.1} parent=39 // pred_fallthru
          _
      $region40: #{tpu_custom_call.1} parent=5 // pred_fallthru
        _
      %p674 = scmp.le.s32.totalorder 2, %s21
      // Predicated region
      $region45: #{tpu_custom_call.1} parent=5 // pred_check
        %p675 = pneg %p674
      $region46: #{tpu_custom_call.1} parent=5 // pred_check_branch
        %677 = sbr.rel (%p675) target = $region48
      $region47: #{tpu_custom_call.1} parent=5 // pred_region
        %s678 = ssub.s32 %s21, 2
        // Predicated region
        $region49: #{tpu_custom_call.1} parent=47 // pred_check
          %p679 = pneg %p175
        $region50: #{tpu_custom_call.1} parent=47 // pred_check_branch
          %681 = sbr.rel (%p679) target = $region52
        $region51: #{tpu_custom_call.1} parent=47 // pred_region
          %s682 = sand.u32 %s160, 1
          %s683 = scalar_lea.sflag [#allocation6], %s682
          %s684 = sand.u32 %s160, 1
          %s685 = smul.addr %s684, 8
          %s686 = scalar_lea.vmem [#allocation5], %s685
          %687 = dma.done %s683, 128
        $region52: #{tpu_custom_call.1} parent=47 // pred_fallthru
          _
      $region48: #{tpu_custom_call.1} parent=5 // pred_fallthru
        _
    $region6: #{tpu_custom_call.1} parent=1 // loop_footer
      %s25 = sadd.s32 1, %s21
    $region7: #{tpu_custom_call.1} parent=1 // loop_footer_branch
      %20 = sbr.rel target = $region3
    $region8: #{tpu_custom_call.1} parent=1 // loop_exit
      _
    %688 = vsyncpa [#allocation6], 1
    %s689 = scalar_lea.sflag [#allocation6], 1
    %690 = vsyncpa %s689, 1

</llo_original>
